<compile_context>
chip_gen: v6e
topology: v6e:2x2x1
jax: 0.10.0
libtpu: 0.0.40
codegen_flags: <defaults>
</compile_context>

<pallas_src>
import jax
import jax.numpy as jnp
from jax.experimental import pallas as pl
from jax.experimental.pallas import tpu as pltpu


# ----------------------------- model hyper-parameters -----------------------------
NUM_ENCODERS = 2
IN_DIM       = 16          # per-encoder input feature dim
ENC_HID      = 32          # encoder hidden dim
ENC_DIM      = 8           # per-encoder encoded dim  -> encoded_dim_list = [8, 8]
TOTAL_ENC    = NUM_ENCODERS * ENC_DIM          # 16
REG_H1       = 32          # regression_layers = [(16, 32), (32, 16)]
REG_H2       = 16
OUT_DIM      = 1

LANES          = 128       # all padded layer widths fit in one 128-lane vreg group
IN2            = NUM_ENCODERS * IN_DIM          # 32 — flattened input width
MAX_BATCH_TILE = 512        # upper bound on rows per grid step

assert IN2 <= LANES and NUM_ENCODERS * ENC_HID <= LANES
assert max(TOTAL_ENC, REG_H1, REG_H2) <= LANES
assert IN2 % 8 == 0


# ----------------------------------- kernel ---------------------------------------
def combined_kernel(x_ref, w_ref, b_ref, out_ref):
    # x_ref  : (BT, 32)       — [x[0] | x[1]] rows (batch tile)
    # w_ref  : (4, 128, 128)  — [W1_blockdiag, W2_blockdiag, RW1, RW2] zero-padded
    # b_ref  : (8, 128)       — rows: b1_bd, b2_bd, rb1, rb2, w3_row, rb3(bcast), 0, 0
    # out_ref: (BT, 1)        — sigmoid(logit) narrow column
    x = x_ref[...]                                                   # (BT, 32)

    # encoders (both at once, block-diagonal): ReLU(x W1 + b1), ReLU(h W2 + b2)
    w1 = w_ref[0, 0:IN2, :]                                          # static (32,128) view
    h = jnp.maximum(
        jnp.dot(x, w1, preferred_element_type=jnp.float32) + b_ref[0:1, :], 0.0)
    z = jnp.maximum(
        jnp.dot(h, w_ref[1], preferred_element_type=jnp.float32) + b_ref[1:2, :], 0.0)
    # z lanes [0:TOTAL_ENC] == torch.cat(encoded_outputs, dim=1); other lanes are 0.

    # regression head: Linear+ReLU, Linear+ReLU
    r1 = jnp.maximum(
        jnp.dot(z, w_ref[2], preferred_element_type=jnp.float32) + b_ref[2:3, :], 0.0)
    r2 = jnp.maximum(
        jnp.dot(r1, w_ref[3], preferred_element_type=jnp.float32) + b_ref[3:4, :], 0.0)

    # final Linear(REG_H2 -> 1) as VPU multiply + XLU lane reduction (no N=1 MXU pass)
    s = jnp.sum(r2 * b_ref[4:5, :], axis=-1, keepdims=True)          # (BT, 1)
    out_ref[...] = jax.nn.sigmoid(s + b_ref[5:6, 0:1])               # + final bias


# ------------------------------ parameter packing ----------------------------------
def pack_params(p):
    """Pack the 14 weight/bias tensors into two operands: (4,128,128) and (8,128)."""
    w1 = jnp.zeros((LANES, LANES), jnp.float32)
    w1 = w1.at[0:IN_DIM, 0:ENC_HID].set(p["e0w1"])
    w1 = w1.at[IN_DIM:2 * IN_DIM, ENC_HID:2 * ENC_HID].set(p["e1w1"])

    w2 = jnp.zeros((LANES, LANES), jnp.float32)
    w2 = w2.at[0:ENC_HID, 0:ENC_DIM].set(p["e0w2"])
    w2 = w2.at[ENC_HID:2 * ENC_HID, ENC_DIM:2 * ENC_DIM].set(p["e1w2"])

    rw1 = jnp.zeros((LANES, LANES), jnp.float32).at[0:TOTAL_ENC, 0:REG_H1].set(p["rw1"])
    rw2 = jnp.zeros((LANES, LANES), jnp.float32).at[0:REG_H1, 0:REG_H2].set(p["rw2"])

    w_packed = jnp.stack([w1, w2, rw1, rw2])                         # (4, 128, 128)

    b = jnp.zeros((8, LANES), jnp.float32)
    b = b.at[0, 0:ENC_HID].set(p["e0b1"][0])
    b = b.at[0, ENC_HID:2 * ENC_HID].set(p["e1b1"][0])
    b = b.at[1, 0:ENC_DIM].set(p["e0b2"][0])
    b = b.at[1, ENC_DIM:2 * ENC_DIM].set(p["e1b2"][0])
    b = b.at[2, 0:REG_H1].set(p["rb1"][0])
    b = b.at[3, 0:REG_H2].set(p["rb2"][0])
    b = b.at[4, 0:REG_H2].set(p["rw3"][:, 0])                        # final weight column
    b = b.at[5, :].set(p["rb3"][0, 0])                               # final bias (broadcast)
    return w_packed, b


# ------------------------------ batch-tile selection --------------------------------
def _round_up(n, m):
    return pl.cdiv(n, m) * m


def _pick_batch_tile(batch):
    """Pick (tile, padded_batch): big tiles to amortize per-step overhead, but keep
    >= 2 grid steps when B > 8 so v7x can shard the parallel axis across its 2 TCs."""
    bp = _round_up(batch, 8)
    if bp <= 8:
        return 8, 8
    tile = min(MAX_BATCH_TILE, _round_up(bp // 2, 8))
    return tile, _round_up(bp, tile)


# ----------------------------------- wrapper ---------------------------------------
def combined_forward(x, w_packed, b_packed):
    """x: (NUM_ENCODERS, B, IN_DIM) float32 -> (B, 1) float32."""
    B = x.shape[1]
    tile, bp = _pick_batch_tile(B)

    # layout plumbing (outside the kernel): flatten encoder inputs to (B, 32);
    # pad batch rows with zeros only if needed (no 128-lane padding anymore).
    x_flat = jnp.concatenate([x[i] for i in range(NUM_ENCODERS)], axis=1)   # (B, 32)
    if bp != B:
        x_flat = jnp.pad(x_flat, ((0, bp - B), (0, 0)))

    out = pl.pallas_call(
        combined_kernel,
        out_shape=jax.ShapeDtypeStruct((bp, OUT_DIM), jnp.float32),
        grid=(bp // tile,),
        in_specs=[
            pl.BlockSpec((tile, IN2), lambda i: (i, 0)),
            pl.BlockSpec((4, LANES, LANES), lambda i: (0, 0, 0)),     # grid-invariant
            pl.BlockSpec((8, LANES), lambda i: (0, 0)),               # grid-invariant
        ],
        out_specs=pl.BlockSpec((tile, OUT_DIM), lambda i: (i, 0)),
        compiler_params=pltpu.CompilerParams(dimension_semantics=("parallel",)),
    )(x_flat, w_packed, b_packed)

    return out[:B]


# ------------------------- deterministic parameter init ---------------------------
def _linear_params(key, fan_in, fan_out):
    """PyTorch-style uniform(-1/sqrt(fan_in), 1/sqrt(fan_in)); returned pre-transposed (in,out)."""
    kw, kb = jax.random.split(key)
    bound = 1.0 / jnp.sqrt(float(fan_in))
    w = jax.random.uniform(kw, (fan_in, fan_out), jnp.float32, -bound, bound)
    b = jax.random.uniform(kb, (1, fan_out), jnp.float32, -bound, bound)
    return w, b


def make_params(key):
    keys = jax.random.split(key, 7)
    p = {}
    p["e0w1"], p["e0b1"] = _linear_params(keys[0], IN_DIM, ENC_HID)
    p["e0w2"], p["e0b2"] = _linear_params(keys[1], ENC_HID, ENC_DIM)
    p["e1w1"], p["e1b1"] = _linear_params(keys[2], IN_DIM, ENC_HID)
    p["e1w2"], p["e1b2"] = _linear_params(keys[3], ENC_HID, ENC_DIM)
    p["rw1"], p["rb1"] = _linear_params(keys[4], TOTAL_ENC, REG_H1)
    p["rw2"], p["rb2"] = _linear_params(keys[5], REG_H1, REG_H2)
    p["rw3"], p["rb3"] = _linear_params(keys[6], REG_H2, OUT_DIM)
    return p


# -------------------------------- pure-JAX reference -------------------------------
def reference_forward(x, p):
    def enc(xi, w1, b1, w2, b2):
        h = jnp.maximum(xi @ w1 + b1, 0.0)
        return jnp.maximum(h @ w2 + b2, 0.0)
    z0 = enc(x[0], p["e0w1"], p["e0b1"], p["e0w2"], p["e0b2"])
    z1 = enc(x[1], p["e1w1"], p["e1b1"], p["e1w2"], p["e1b2"])
    c = jnp.concatenate([z0, z1], axis=1)
    r1 = jnp.maximum(c @ p["rw1"] + p["rb1"], 0.0)
    r2 = jnp.maximum(r1 @ p["rw2"] + p["rb2"], 0.0)
    return jax.nn.sigmoid(r2 @ p["rw3"] + p["rb3"])


if __name__ == "__main__":
    key = jax.random.PRNGKey(0)
    kx, kp = jax.random.split(key)
    params = make_params(kp)
    w_packed, b_packed = pack_params(params)   # one-time packing (layout plumbing)

    # primary small-shape run (B=8 -> grid=(1,), tile=8)
    BATCH = 8
    x = jax.random.normal(kx, (NUM_ENCODERS, BATCH, IN_DIM), jnp.float32)
    out = jax.block_until_ready(combined_forward(x, w_packed, b_packed))
    ref = reference_forward(x, params)
    assert out.shape == (BATCH, OUT_DIM), out.shape
    assert jnp.allclose(out, ref, atol=1e-5, rtol=1e-5), (out, ref)

    # secondary run: exercises multi-step grid (>=2 steps) and batch-row padding
    B2 = 50
    x2 = jax.random.normal(jax.random.PRNGKey(1), (NUM_ENCODERS, B2, IN_DIM), jnp.float32)
    out2 = jax.block_until_ready(combined_forward(x2, w_packed, b_packed))
    ref2 = reference_forward(x2, params)
    assert out2.shape == (B2, OUT_DIM), out2.shape
    assert jnp.allclose(out2, ref2, atol=1e-5, rtol=1e-5), (out2, ref2)

    print("KERNEL_OK")
</pallas_src>

<mosaic_0001>
module attributes {stable_mosaic.version = 11 : i64} {
  func.func @combined_kernel(%arg0: i32, %arg1: memref<8x32xf32, #tpu.memory_space<vmem>>, %arg2: memref<4x128x128xf32, #tpu.memory_space<vmem>>, %arg3: memref<8x128xf32, #tpu.memory_space<vmem>>, %arg4: memref<8x1xf32, #tpu.memory_space<vmem>>) attributes {dimension_semantics = [#tpu.dimension_semantics<parallel>], iteration_bounds = array<i64: 1>, scalar_prefetch = 0 : i64, scratch_operands = 0 : i64, tpu.core_type = #tpu.core_type<tc>, window_params = [{transform_indices = @transform_0, window_bounds = array<i64: 8, 32>}, {pipeline_mode = #tpu.pipeline_mode<synchronous>, transform_indices = @transform_1, window_bounds = array<i64: 4, 128, 128>}, {pipeline_mode = #tpu.pipeline_mode<synchronous>, transform_indices = @transform_2, window_bounds = array<i64: 8, 128>}, {transform_indices = @transform_3, window_bounds = array<i64: 8, 1>}]} {
    %c0 = arith.constant 0 : index
    %c0_0 = arith.constant 0 : index
    %0 = vector.load %arg1[%c0, %c0_0] : memref<8x32xf32, #tpu.memory_space<vmem>>, vector<8x32xf32>
    %c0_1 = arith.constant 0 : index
    %c0_2 = arith.constant 0 : index
    %c0_3 = arith.constant 0 : index
    %1 = vector.load %arg2[%c0_1, %c0_2, %c0_3] : memref<4x128x128xf32, #tpu.memory_space<vmem>>, vector<1x32x128xf32>
    %2 = vector.shape_cast %1 : vector<1x32x128xf32> to vector<32x128xf32>
    %cst = arith.constant dense<0.000000e+00> : vector<8x128xf32>
    %3 = tpu.matmul %0, %2, %cst {dimension_numbers = #tpu.dot_dimension_numbers<[1], [0], [0], [1], [0, 0, 1, 1], [], []>} : vector<8x32xf32>, vector<32x128xf32>, vector<8x128xf32> -> vector<8x128xf32>
    %c0_4 = arith.constant 0 : index
    %c0_5 = arith.constant 0 : index
    %4 = vector.load %arg3[%c0_4, %c0_5] : memref<8x128xf32, #tpu.memory_space<vmem>>, vector<1x128xf32>
    %5 = vector.broadcast %4 : vector<1x128xf32> to vector<8x128xf32>
    %6 = arith.addf %3, %5 : vector<8x128xf32>
    %cst_6 = arith.constant 0.000000e+00 : f32
    %7 = vector.broadcast %cst_6 : f32 to vector<8x128xf32>
    %8 = arith.maximumf %6, %7 : vector<8x128xf32>
    %c1 = arith.constant 1 : index
    %c0_7 = arith.constant 0 : index
    %c0_8 = arith.constant 0 : index
    %9 = vector.load %arg2[%c1, %c0_7, %c0_8] : memref<4x128x128xf32, #tpu.memory_space<vmem>>, vector<1x128x128xf32>
    %10 = vector.shape_cast %9 : vector<1x128x128xf32> to vector<128x128xf32>
    %cst_9 = arith.constant dense<0.000000e+00> : vector<8x128xf32>
    %11 = tpu.matmul %8, %10, %cst_9 {dimension_numbers = #tpu.dot_dimension_numbers<[1], [0], [0], [1], [0, 0, 1, 1], [], []>} : vector<8x128xf32>, vector<128x128xf32>, vector<8x128xf32> -> vector<8x128xf32>
    %c1_10 = arith.constant 1 : index
    %c0_11 = arith.constant 0 : index
    %12 = vector.load %arg3[%c1_10, %c0_11] : memref<8x128xf32, #tpu.memory_space<vmem>>, vector<1x128xf32>
    %13 = vector.broadcast %12 : vector<1x128xf32> to vector<8x128xf32>
    %14 = arith.addf %11, %13 : vector<8x128xf32>
    %cst_12 = arith.constant 0.000000e+00 : f32
    %15 = vector.broadcast %cst_12 : f32 to vector<8x128xf32>
    %16 = arith.maximumf %14, %15 : vector<8x128xf32>
    %c2 = arith.constant 2 : index
    %c0_13 = arith.constant 0 : index
    %c0_14 = arith.constant 0 : index
    %17 = vector.load %arg2[%c2, %c0_13, %c0_14] : memref<4x128x128xf32, #tpu.memory_space<vmem>>, vector<1x128x128xf32>
    %18 = vector.shape_cast %17 : vector<1x128x128xf32> to vector<128x128xf32>
    %cst_15 = arith.constant dense<0.000000e+00> : vector<8x128xf32>
    %19 = tpu.matmul %16, %18, %cst_15 {dimension_numbers = #tpu.dot_dimension_numbers<[1], [0], [0], [1], [0, 0, 1, 1], [], []>} : vector<8x128xf32>, vector<128x128xf32>, vector<8x128xf32> -> vector<8x128xf32>
    %c2_16 = arith.constant 2 : index
    %c0_17 = arith.constant 0 : index
    %20 = vector.load %arg3[%c2_16, %c0_17] : memref<8x128xf32, #tpu.memory_space<vmem>>, vector<1x128xf32>
    %21 = vector.broadcast %20 : vector<1x128xf32> to vector<8x128xf32>
    %22 = arith.addf %19, %21 : vector<8x128xf32>
    %cst_18 = arith.constant 0.000000e+00 : f32
    %23 = vector.broadcast %cst_18 : f32 to vector<8x128xf32>
    %24 = arith.maximumf %22, %23 : vector<8x128xf32>
    %c3 = arith.constant 3 : index
    %c0_19 = arith.constant 0 : index
    %c0_20 = arith.constant 0 : index
    %25 = vector.load %arg2[%c3, %c0_19, %c0_20] : memref<4x128x128xf32, #tpu.memory_space<vmem>>, vector<1x128x128xf32>
    %26 = vector.shape_cast %25 : vector<1x128x128xf32> to vector<128x128xf32>
    %cst_21 = arith.constant dense<0.000000e+00> : vector<8x128xf32>
    %27 = tpu.matmul %24, %26, %cst_21 {dimension_numbers = #tpu.dot_dimension_numbers<[1], [0], [0], [1], [0, 0, 1, 1], [], []>} : vector<8x128xf32>, vector<128x128xf32>, vector<8x128xf32> -> vector<8x128xf32>
    %c3_22 = arith.constant 3 : index
    %c0_23 = arith.constant 0 : index
    %28 = vector.load %arg3[%c3_22, %c0_23] : memref<8x128xf32, #tpu.memory_space<vmem>>, vector<1x128xf32>
    %29 = vector.broadcast %28 : vector<1x128xf32> to vector<8x128xf32>
    %30 = arith.addf %27, %29 : vector<8x128xf32>
    %cst_24 = arith.constant 0.000000e+00 : f32
    %31 = vector.broadcast %cst_24 : f32 to vector<8x128xf32>
    %32 = arith.maximumf %30, %31 : vector<8x128xf32>
    %c4 = arith.constant 4 : index
    %c0_25 = arith.constant 0 : index
    %33 = vector.load %arg3[%c4, %c0_25] : memref<8x128xf32, #tpu.memory_space<vmem>>, vector<1x128xf32>
    %34 = vector.broadcast %33 : vector<1x128xf32> to vector<8x128xf32>
    %35 = arith.mulf %32, %34 : vector<8x128xf32>
    %cst_26 = arith.constant dense<0.000000e+00> : vector<8xf32>
    %36 = vector.multi_reduction <add>, %35, %cst_26 [1] : vector<8x128xf32> to vector<8xf32>
    %37 = vector.shape_cast %36 : vector<8xf32> to vector<8x1xf32>
    %c5 = arith.constant 5 : index
    %c0_27 = arith.constant 0 : index
    %38 = vector.load %arg3[%c5, %c0_27] : memref<8x128xf32, #tpu.memory_space<vmem>>, vector<1x1xf32>
    %39 = vector.broadcast %38 : vector<1x1xf32> to vector<8x1xf32>
    %40 = arith.addf %37, %39 : vector<8x1xf32>
    %41 = arith.negf %40 : vector<8x1xf32>
    %42 = math.exp %41 : vector<8x1xf32>
    %cst_28 = arith.constant 1.000000e+00 : f32
    %43 = vector.broadcast %cst_28 : f32 to vector<8x1xf32>
    %44 = arith.addf %43, %42 : vector<8x1xf32>
    %45 = arith.divf %43, %44 : vector<8x1xf32>
    %c0_29 = arith.constant 0 : index
    %c0_30 = arith.constant 0 : index
    %46 = vector.load %arg4[%c0_29, %c0_30] : memref<8x1xf32, #tpu.memory_space<vmem>>, vector<8x1xf32>
    tpu.vector_store %arg4[%c0_29, %c0_30], %45 {strides = array<i32>} : memref<8x1xf32, #tpu.memory_space<vmem>>, vector<8x1xf32>,
    return
  }
  func.func @transform_0(%arg0: i32) -> (i32, i32) {
    %c0_i32 = arith.constant 0 : i32
    %c0_i32_0 = arith.constant 0 : i32
    return %arg0, %c0_i32 : i32, i32
  }
  func.func @transform_1(%arg0: i32) -> (i32, i32, i32) {
    %c0_i32 = arith.constant 0 : i32
    %c0_i32_0 = arith.constant 0 : i32
    %c0_i32_1 = arith.constant 0 : i32
    %c0_i32_2 = arith.constant 0 : i32
    return %c0_i32, %c0_i32_0, %c0_i32_1 : i32, i32, i32
  }
  func.func @transform_2(%arg0: i32) -> (i32, i32) {
    %c0_i32 = arith.constant 0 : i32
    %c0_i32_0 = arith.constant 0 : i32
    %c0_i32_1 = arith.constant 0 : i32
    return %c0_i32, %c0_i32_0 : i32, i32
  }
  func.func @transform_3(%arg0: i32) -> (i32, i32) {
    %c0_i32 = arith.constant 0 : i32
    %c0_i32_0 = arith.constant 0 : i32
    return %arg0, %c0_i32 : i32, i32
  }
}

</mosaic_0001>

<llo_original>
// kernel: tpu_custom_call.1
$region0: #{tpu_custom_call.1}
  #allocation0 [shape = 'u32[]', space=smem, size = 0x4, offset = 0x4, fixed_abs, tag = 'smem constant byte address 0x4 - core index']
  #allocation1 [shape = 'u32[144,128]{1,0:T(1,128)}', space=vmem, size = 0x12000, scoped, tag = 'internal scratch']
  %s0 = inlined_call_operand.hbm [shape: f32[8,32], index: 0, kind: input, shape index: {}]
  %s1 = inlined_call_operand.hbm [shape: f32[4,128,128], index: 1, kind: input, shape index: {}]
  %s2 = inlined_call_operand.hbm [shape: f32[8,128], index: 2, kind: input, shape index: {}]
  %s3 = inlined_call_operand.vmem [shape: f32[8,1], index: 3, kind: output, shape index: {}]
  %s4 = sld [smem:[#allocation0]]
  $region34: #{tpu_custom_call.1} parent=0
    _
  %s6 = ssub.s32 1, %s4
  %s7 = scalar_select 0, %s6, %s4
  $region1: #{tpu_custom_call.1} parent=0
    #allocation2 [shape = 'u8[4096]{0}', space=vmem, size = 0x1000, scoped, tag = 'input window, operand 0, single buffered']
    #allocation3 [shape = 's32[1]{0}', space=sflag, size = 0x4, scoped, tag = 'scoped memory for tpu_custom_call.1']
    #allocation4 [shape = 'u8[262144]{0}', space=vmem, size = 0x40000, scoped, tag = 'input window, operand 1, single buffered']
    #allocation5 [shape = 's32[1]{0}', space=sflag, size = 0x4, scoped, tag = 'scoped memory for tpu_custom_call.1']
    #allocation6 [shape = 'u8[4096]{0}', space=vmem, size = 0x1000, scoped, tag = 'input window, operand 2, single buffered']
    %8 = vsyncpa [#allocation3], 0
    %9 = vsyncpa [#allocation5], 0
    // Predicated region
    $region2: #{tpu_custom_call.1} parent=1 // pred_check
      _
    $region3: #{tpu_custom_call.1} parent=1 // pred_check_branch
      %11 = sbr.rel (0) target = $region5
    $region4: #{tpu_custom_call.1} parent=1 // pred_region
      %s13 = ssub.s32 128, 128
      %14 = vsyncadd [#allocation3], %s13
      %s16 = sshll.u32 [#allocation2], 4
      %s17 = int_to_ptr.vmem [resolvable:$true] %s16
      %19 = dma.hbm_to_vmem [thread:$0]  %s0, 128, %s17, [#allocation3]
    $region5: #{tpu_custom_call.1} parent=1 // pred_fallthru
      _
    // Predicated region
    $region6: #{tpu_custom_call.1} parent=1 // pred_check
      _
    $region7: #{tpu_custom_call.1} parent=1 // pred_check_branch
      %21 = sbr.rel (0) target = $region9
    $region8: #{tpu_custom_call.1} parent=1 // pred_region
      %s23 = ssub.s32 8192, 8192
      %24 = vsyncadd [#allocation5], %s23
      %s25 = sshll.u32 [#allocation4], 4
      %s26 = int_to_ptr.vmem [resolvable:$true] %s25
      %31 = dma.hbm_to_vmem [thread:$0]  %s1, 8192, %s26, [#allocation5], 128, 128, 8
    $region9: #{tpu_custom_call.1} parent=1 // pred_fallthru
      _
    // Predicated region
    $region10: #{tpu_custom_call.1} parent=1 // pred_check
      _
    $region11: #{tpu_custom_call.1} parent=1 // pred_check_branch
      %33 = sbr.rel (0) target = $region13
    $region12: #{tpu_custom_call.1} parent=1 // pred_region
      %s35 = ssub.s32 128, 128
      %36 = vsyncadd [#allocation5], %s35
      %s38 = sshll.u32 [#allocation6], 4
      %s39 = int_to_ptr.vmem [resolvable:$true] %s38
      %41 = dma.hbm_to_vmem [thread:$0]  %s2, 128, %s39, [#allocation5]
    $region13: #{tpu_custom_call.1} parent=1 // pred_fallthru
      _
    // Predicated region
    $region14: #{tpu_custom_call.1} parent=1 // pred_check
      _
    $region15: #{tpu_custom_call.1} parent=1 // pred_check_branch
      %43 = sbr.rel (0) target = $region17
    $region16: #{tpu_custom_call.1} parent=1 // pred_region
      %44 = dma.done [#allocation3], 128
    $region17: #{tpu_custom_call.1} parent=1 // pred_fallthru
      _
    // Predicated region
    $region18: #{tpu_custom_call.1} parent=1 // pred_check
      _
    $region19: #{tpu_custom_call.1} parent=1 // pred_check_branch
      %46 = sbr.rel (0) target = $region21
    $region20: #{tpu_custom_call.1} parent=1 // pred_region
      %47 = dma.done [#allocation5], 8192
    $region21: #{tpu_custom_call.1} parent=1 // pred_fallthru
      _
    // Predicated region
    $region22: #{tpu_custom_call.1} parent=1 // pred_check
      _
    $region23: #{tpu_custom_call.1} parent=1 // pred_check_branch
      %49 = sbr.rel (0) target = $region25
    $region24: #{tpu_custom_call.1} parent=1 // pred_region
      %50 = dma.done [#allocation5], 128
    $region25: #{tpu_custom_call.1} parent=1 // pred_fallthru
      _
    %v51 = vld [vmem:[#allocation2] sm:$0xff]
    %v52 = vld [vmem:[#allocation4] sm:$0xff]
    %v53 = vld [vmem:[#allocation4 + $0x8] sm:$0xff]
    %v54 = vld [vmem:[#allocation4 + $0x10] sm:$0xff]
    %v55 = vld [vmem:[#allocation4 + $0x18] sm:$0xff]
    %v56 = vld [vmem:[#allocation6] sm:$0x1]
    %v57 = vlaneseq
    %v58 = vshrl.u32 %v57, 7
    %v59 = vsub.s32 0, %v58
    %v60 = vrot.slane %v56, %v59
    %vm61 = vcmask 261120
    %v63 = vsel %vm61, %v51, 0
    %65 = vmatprep.subr.mxu0 0.0
    %66 = vmatpush1.msra.mxu0 0.0
    %67 = vmatprep.subr.mxu0 0.0
    %68 = vmatpush1.msra.mxu0 0.0
    %69 = vmatprep.subr.mxu0 0.0
    %70 = vmatpush1.msra.mxu0 0.0
    %71 = vmatprep.subr.mxu0 0.0
    %72 = vmatpush1.msra.mxu0 0.0
    %73 = vmatprep.subr.mxu0 0.0
    %74 = vmatpush1.msra.mxu0 0.0
    %75 = vmatprep.subr.mxu0 0.0
    %76 = vmatpush1.msra.mxu0 0.0
    %77 = vmatprep.subr.mxu0 0.0
    %78 = vmatpush1.msra.mxu0 0.0
    %79 = vmatprep.subr.mxu0 0.0
    %80 = vmatpush1.msra.mxu0 0.0
    %81 = vmatprep.subr.mxu0 0.0
    %82 = vmatpush1.msra.mxu0 0.0
    %83 = vmatprep.subr.mxu0 0.0
    %84 = vmatpush1.msra.mxu0 0.0
    %85 = vmatprep.subr.mxu0 0.0
    %86 = vmatpush1.msra.mxu0 0.0
    %87 = vmatprep.subr.mxu0 0.0
    %88 = vmatpush1.msra.mxu0 0.0
    %89 = vmatprep.subr.mxu0 0.0
    %90 = vmatpush1.msra.mxu0 %v55
    %91 = vmatprep.subr.mxu0 0.0
    %92 = vmatpush1.msra.mxu0 %v54
    %93 = vmatprep.subr.mxu0 0.0
    %94 = vmatpush1.msra.mxu0 %v53
    %95 = vmatprep.subr.mxu0 0.0
    %96 = vmatpush1.msra.mxu0 %v52
    %97 = vmatprep.subr.mxu0 0.0
    %98 = vmatpush2.msra.mxu0 0.0
    %99 = vmatprep.subr.mxu0 0.0
    %100 = vmatpush2.msra.mxu0 0.0
    %101 = vmatprep.subr.mxu0 0.0
    %102 = vmatpush2.msra.mxu0 0.0
    %103 = vmatprep.subr.mxu0 0.0
    %104 = vmatpush2.msra.mxu0 0.0
    %105 = vmatprep.subr.mxu0 0.0
    %106 = vmatpush2.msra.mxu0 0.0
    %107 = vmatprep.subr.mxu0 0.0
    %108 = vmatpush2.msra.mxu0 0.0
    %109 = vmatprep.subr.mxu0 0.0
    %110 = vmatpush2.msra.mxu0 0.0
    %111 = vmatprep.subr.mxu0 0.0
    %112 = vmatpush2.msra.mxu0 0.0
    %113 = vmatprep.subr.mxu0 0.0
    %114 = vmatpush2.msra.mxu0 0.0
    %115 = vmatprep.subr.mxu0 0.0
    %116 = vmatpush2.msra.mxu0 0.0
    %117 = vmatprep.subr.mxu0 0.0
    %118 = vmatpush2.msra.mxu0 0.0
    %119 = vmatprep.subr.mxu0 0.0
    %120 = vmatpush2.msra.mxu0 0.0
    %121 = vmatprep.subr.mxu0 0.0
    %122 = vmatpush2.msra.mxu0 0.0
    %123 = vmatprep.subr.mxu0 0.0
    %124 = vmatpush2.msra.mxu0 0.0
    %125 = vmatprep.subr.mxu0 0.0
    %126 = vmatpush2.msra.mxu0 0.0
    %127 = vmatprep.subr.mxu0 0.0
    %128 = vmatpush2.msra.mxu0 0.0
    %129 = vmatprep.mubr.f32.mxu0 0.0
    %130 = vmatmul.mubr.f32.gmra.mxu0 %v63
    %v131 = vpop.f32.mrf.mxu0
    %v132 = vadd.f32 %v60, %v131
    %v133 = vpop.f32.mrf.mxu0
    %134 = vdwg.mxu0
    %v135 = vmax.f32 %v132, 0.0
    %s136 = scalar_lea.vmem [#allocation4], 128
    %v137 = vld [vmem:[%s136] sm:$0xff]
    %v138 = vld [vmem:[%s136 + $0x8] sm:$0xff]
    %v139 = vld [vmem:[%s136 + $0x10] sm:$0xff]
    %v140 = vld [vmem:[%s136 + $0x18] sm:$0xff]
    %v141 = vld [vmem:[%s136 + $0x20] sm:$0xff]
    %v142 = vld [vmem:[%s136 + $0x28] sm:$0xff]
    %v143 = vld [vmem:[%s136 + $0x30] sm:$0xff]
    %v144 = vld [vmem:[%s136 + $0x38] sm:$0xff]
    %v145 = vld [vmem:[%s136 + $0x40] sm:$0xff]
    %v146 = vld [vmem:[%s136 + $0x48] sm:$0xff]
    %v147 = vld [vmem:[%s136 + $0x50] sm:$0xff]
    %v148 = vld [vmem:[%s136 + $0x58] sm:$0xff]
    %v149 = vld [vmem:[%s136 + $0x60] sm:$0xff]
    %v150 = vld [vmem:[%s136 + $0x68] sm:$0xff]
    %v151 = vld [vmem:[%s136 + $0x70] sm:$0xff]
    %v152 = vld [vmem:[%s136 + $0x78] sm:$0xff]
    %v153 = vld [vmem:[#allocation6 + $0x1] sm:$0x1]
    %v154 = vlaneseq
    %v155 = vshrl.u32 %v154, 7
    %v156 = vsub.s32 0, %v155
    %v157 = vrot.slane %v153, %v156
    %158 = vmatprep.subr.mxu0 0.0
    %159 = vmatpush1.msra.mxu0 %v152
    %160 = vmatprep.subr.mxu0 0.0
    %161 = vmatpush1.msra.mxu0 %v151
    %162 = vmatprep.subr.mxu0 0.0
    %163 = vmatpush1.msra.mxu0 %v150
    %164 = vmatprep.subr.mxu0 0.0
    %165 = vmatpush1.msra.mxu0 %v149
    %166 = vmatprep.subr.mxu0 0.0
    %167 = vmatpush1.msra.mxu0 %v148
    %168 = vmatprep.subr.mxu0 0.0
    %169 = vmatpush1.msra.mxu0 %v147
    %170 = vmatprep.subr.mxu0 0.0
    %171 = vmatpush1.msra.mxu0 %v146
    %172 = vmatprep.subr.mxu0 0.0
    %173 = vmatpush1.msra.mxu0 %v145
    %174 = vmatprep.subr.mxu0 0.0
    %175 = vmatpush1.msra.mxu0 %v144
    %176 = vmatprep.subr.mxu0 0.0
    %177 = vmatpush1.msra.mxu0 %v143
    %178 = vmatprep.subr.mxu0 0.0
    %179 = vmatpush1.msra.mxu0 %v142
    %180 = vmatprep.subr.mxu0 0.0
    %181 = vmatpush1.msra.mxu0 %v141
    %182 = vmatprep.subr.mxu0 0.0
    %183 = vmatpush1.msra.mxu0 %v140
    %184 = vmatprep.subr.mxu0 0.0
    %185 = vmatpush1.msra.mxu0 %v139
    %186 = vmatprep.subr.mxu0 0.0
    %187 = vmatpush1.msra.mxu0 %v138
    %188 = vmatprep.subr.mxu0 0.0
    %189 = vmatpush1.msra.mxu0 %v137
    %190 = vmatprep.subr.mxu0 0.0
    %191 = vmatpush2.msra.mxu0 0.0
    %192 = vmatprep.subr.mxu0 0.0
    %193 = vmatpush2.msra.mxu0 0.0
    %194 = vmatprep.subr.mxu0 0.0
    %195 = vmatpush2.msra.mxu0 0.0
    %196 = vmatprep.subr.mxu0 0.0
    %197 = vmatpush2.msra.mxu0 0.0
    %198 = vmatprep.subr.mxu0 0.0
    %199 = vmatpush2.msra.mxu0 0.0
    %200 = vmatprep.subr.mxu0 0.0
    %201 = vmatpush2.msra.mxu0 0.0
    %202 = vmatprep.subr.mxu0 0.0
    %203 = vmatpush2.msra.mxu0 0.0
    %204 = vmatprep.subr.mxu0 0.0
    %205 = vmatpush2.msra.mxu0 0.0
    %206 = vmatprep.subr.mxu0 0.0
    %207 = vmatpush2.msra.mxu0 0.0
    %208 = vmatprep.subr.mxu0 0.0
    %209 = vmatpush2.msra.mxu0 0.0
    %210 = vmatprep.subr.mxu0 0.0
    %211 = vmatpush2.msra.mxu0 0.0
    %212 = vmatprep.subr.mxu0 0.0
    %213 = vmatpush2.msra.mxu0 0.0
    %214 = vmatprep.subr.mxu0 0.0
    %215 = vmatpush2.msra.mxu0 0.0
    %216 = vmatprep.subr.mxu0 0.0
    %217 = vmatpush2.msra.mxu0 0.0
    %218 = vmatprep.subr.mxu0 0.0
    %219 = vmatpush2.msra.mxu0 0.0
    %220 = vmatprep.subr.mxu0 0.0
    %221 = vmatpush2.msra.mxu0 0.0
    %222 = vmatprep.mubr.f32.mxu0 0.0
    %223 = vmatmul.mubr.f32.gmra.mxu0 %v135
    %v224 = vpop.f32.mrf.mxu0
    %v225 = vadd.f32 %v157, %v224
    %v226 = vpop.f32.mrf.mxu0
    %227 = vdwg.mxu0
    %v228 = vmax.f32 %v225, 0.0
    %s229 = scalar_lea.vmem [#allocation4], 256
    %v230 = vld [vmem:[%s229] sm:$0xff]
    %v231 = vld [vmem:[%s229 + $0x8] sm:$0xff]
    %v232 = vld [vmem:[%s229 + $0x10] sm:$0xff]
    %v233 = vld [vmem:[%s229 + $0x18] sm:$0xff]
    %v234 = vld [vmem:[%s229 + $0x20] sm:$0xff]
    %v235 = vld [vmem:[%s229 + $0x28] sm:$0xff]
    %v236 = vld [vmem:[%s229 + $0x30] sm:$0xff]
    %v237 = vld [vmem:[%s229 + $0x38] sm:$0xff]
    %v238 = vld [vmem:[%s229 + $0x40] sm:$0xff]
    %v239 = vld [vmem:[%s229 + $0x48] sm:$0xff]
    %v240 = vld [vmem:[%s229 + $0x50] sm:$0xff]
    %v241 = vld [vmem:[%s229 + $0x58] sm:$0xff]
    %v242 = vld [vmem:[%s229 + $0x60] sm:$0xff]
    %v243 = vld [vmem:[%s229 + $0x68] sm:$0xff]
    %v244 = vld [vmem:[%s229 + $0x70] sm:$0xff]
    %v245 = vld [vmem:[%s229 + $0x78] sm:$0xff]
    %v246 = vld [vmem:[#allocation6 + $0x2] sm:$0x1]
    %v247 = vlaneseq
    %v248 = vshrl.u32 %v247, 7
    %v249 = vsub.s32 0, %v248
    %v250 = vrot.slane %v246, %v249
    %251 = vmatprep.subr.mxu0 0.0
    %252 = vmatpush1.msra.mxu0 %v245
    %253 = vmatprep.subr.mxu0 0.0
    %254 = vmatpush1.msra.mxu0 %v244
    %255 = vmatprep.subr.mxu0 0.0
    %256 = vmatpush1.msra.mxu0 %v243
    %257 = vmatprep.subr.mxu0 0.0
    %258 = vmatpush1.msra.mxu0 %v242
    %259 = vmatprep.subr.mxu0 0.0
    %260 = vmatpush1.msra.mxu0 %v241
    %261 = vmatprep.subr.mxu0 0.0
    %262 = vmatpush1.msra.mxu0 %v240
    %263 = vmatprep.subr.mxu0 0.0
    %264 = vmatpush1.msra.mxu0 %v239
    %265 = vmatprep.subr.mxu0 0.0
    %266 = vmatpush1.msra.mxu0 %v238
    %267 = vmatprep.subr.mxu0 0.0
    %268 = vmatpush1.msra.mxu0 %v237
    %269 = vmatprep.subr.mxu0 0.0
    %270 = vmatpush1.msra.mxu0 %v236
    %271 = vmatprep.subr.mxu0 0.0
    %272 = vmatpush1.msra.mxu0 %v235
    %273 = vmatprep.subr.mxu0 0.0
    %274 = vmatpush1.msra.mxu0 %v234
    %275 = vmatprep.subr.mxu0 0.0
    %276 = vmatpush1.msra.mxu0 %v233
    %277 = vmatprep.subr.mxu0 0.0
    %278 = vmatpush1.msra.mxu0 %v232
    %279 = vmatprep.subr.mxu0 0.0
    %280 = vmatpush1.msra.mxu0 %v231
    %281 = vmatprep.subr.mxu0 0.0
    %282 = vmatpush1.msra.mxu0 %v230
    %283 = vmatprep.subr.mxu0 0.0
    %284 = vmatpush2.msra.mxu0 0.0
    %285 = vmatprep.subr.mxu0 0.0
    %286 = vmatpush2.msra.mxu0 0.0
    %287 = vmatprep.subr.mxu0 0.0
    %288 = vmatpush2.msra.mxu0 0.0
    %289 = vmatprep.subr.mxu0 0.0
    %290 = vmatpush2.msra.mxu0 0.0
    %291 = vmatprep.subr.mxu0 0.0
    %292 = vmatpush2.msra.mxu0 0.0
    %293 = vmatprep.subr.mxu0 0.0
    %294 = vmatpush2.msra.mxu0 0.0
    %295 = vmatprep.subr.mxu0 0.0
    %296 = vmatpush2.msra.mxu0 0.0
    %297 = vmatprep.subr.mxu0 0.0
    %298 = vmatpush2.msra.mxu0 0.0
    %299 = vmatprep.subr.mxu0 0.0
    %300 = vmatpush2.msra.mxu0 0.0
    %301 = vmatprep.subr.mxu0 0.0
    %302 = vmatpush2.msra.mxu0 0.0
    %303 = vmatprep.subr.mxu0 0.0
    %304 = vmatpush2.msra.mxu0 0.0
    %305 = vmatprep.subr.mxu0 0.0
    %306 = vmatpush2.msra.mxu0 0.0
    %307 = vmatprep.subr.mxu0 0.0
    %308 = vmatpush2.msra.mxu0 0.0
    %309 = vmatprep.subr.mxu0 0.0
    %310 = vmatpush2.msra.mxu0 0.0
    %311 = vmatprep.subr.mxu0 0.0
    %312 = vmatpush2.msra.mxu0 0.0
    %313 = vmatprep.subr.mxu0 0.0
    %314 = vmatpush2.msra.mxu0 0.0
    %315 = vmatprep.mubr.f32.mxu0 0.0
    %316 = vmatmul.mubr.f32.gmra.mxu0 %v228
    %v317 = vpop.f32.mrf.mxu0
    %v318 = vadd.f32 %v250, %v317
    %v319 = vpop.f32.mrf.mxu0
    %320 = vdwg.mxu0
    %v321 = vmax.f32 %v318, 0.0
    %s322 = scalar_lea.vmem [#allocation4], 384
    %v323 = vld [vmem:[%s322] sm:$0xff]
    %v324 = vld [vmem:[%s322 + $0x8] sm:$0xff]
    %v325 = vld [vmem:[%s322 + $0x10] sm:$0xff]
    %v326 = vld [vmem:[%s322 + $0x18] sm:$0xff]
    %v327 = vld [vmem:[%s322 + $0x20] sm:$0xff]
    %v328 = vld [vmem:[%s322 + $0x28] sm:$0xff]
    %v329 = vld [vmem:[%s322 + $0x30] sm:$0xff]
    %v330 = vld [vmem:[%s322 + $0x38] sm:$0xff]
    %v331 = vld [vmem:[%s322 + $0x40] sm:$0xff]
    %v332 = vld [vmem:[%s322 + $0x48] sm:$0xff]
    %v333 = vld [vmem:[%s322 + $0x50] sm:$0xff]
    %v334 = vld [vmem:[%s322 + $0x58] sm:$0xff]
    %v335 = vld [vmem:[%s322 + $0x60] sm:$0xff]
    %v336 = vld [vmem:[%s322 + $0x68] sm:$0xff]
    %v337 = vld [vmem:[%s322 + $0x70] sm:$0xff]
    %v338 = vld [vmem:[%s322 + $0x78] sm:$0xff]
    %v339 = vld [vmem:[#allocation6 + $0x3] sm:$0x1]
    %v340 = vlaneseq
    %v341 = vshrl.u32 %v340, 7
    %v342 = vsub.s32 0, %v341
    %v343 = vrot.slane %v339, %v342
    %344 = vmatprep.subr.mxu0 0.0
    %345 = vmatpush1.msra.mxu0 %v338
    %346 = vmatprep.subr.mxu0 0.0
    %347 = vmatpush1.msra.mxu0 %v337
    %348 = vmatprep.subr.mxu0 0.0
    %349 = vmatpush1.msra.mxu0 %v336
    %350 = vmatprep.subr.mxu0 0.0
    %351 = vmatpush1.msra.mxu0 %v335
    %352 = vmatprep.subr.mxu0 0.0
    %353 = vmatpush1.msra.mxu0 %v334
    %354 = vmatprep.subr.mxu0 0.0
    %355 = vmatpush1.msra.mxu0 %v333
    %356 = vmatprep.subr.mxu0 0.0
    %357 = vmatpush1.msra.mxu0 %v332
    %358 = vmatprep.subr.mxu0 0.0
    %359 = vmatpush1.msra.mxu0 %v331
    %360 = vmatprep.subr.mxu0 0.0
    %361 = vmatpush1.msra.mxu0 %v330
    %362 = vmatprep.subr.mxu0 0.0
    %363 = vmatpush1.msra.mxu0 %v329
    %364 = vmatprep.subr.mxu0 0.0
    %365 = vmatpush1.msra.mxu0 %v328
    %366 = vmatprep.subr.mxu0 0.0
    %367 = vmatpush1.msra.mxu0 %v327
    %368 = vmatprep.subr.mxu0 0.0
    %369 = vmatpush1.msra.mxu0 %v326
    %370 = vmatprep.subr.mxu0 0.0
    %371 = vmatpush1.msra.mxu0 %v325
    %372 = vmatprep.subr.mxu0 0.0
    %373 = vmatpush1.msra.mxu0 %v324
    %374 = vmatprep.subr.mxu0 0.0
    %375 = vmatpush1.msra.mxu0 %v323
    %376 = vmatprep.subr.mxu0 0.0
    %377 = vmatpush2.msra.mxu0 0.0
    %378 = vmatprep.subr.mxu0 0.0
    %379 = vmatpush2.msra.mxu0 0.0
    %380 = vmatprep.subr.mxu0 0.0
    %381 = vmatpush2.msra.mxu0 0.0
    %382 = vmatprep.subr.mxu0 0.0
    %383 = vmatpush2.msra.mxu0 0.0
    %384 = vmatprep.subr.mxu0 0.0
    %385 = vmatpush2.msra.mxu0 0.0
    %386 = vmatprep.subr.mxu0 0.0
    %387 = vmatpush2.msra.mxu0 0.0
    %388 = vmatprep.subr.mxu0 0.0
    %389 = vmatpush2.msra.mxu0 0.0
    %390 = vmatprep.subr.mxu0 0.0
    %391 = vmatpush2.msra.mxu0 0.0
    %392 = vmatprep.subr.mxu0 0.0
    %393 = vmatpush2.msra.mxu0 0.0
    %394 = vmatprep.subr.mxu0 0.0
    %395 = vmatpush2.msra.mxu0 0.0
    %396 = vmatprep.subr.mxu0 0.0
    %397 = vmatpush2.msra.mxu0 0.0
    %398 = vmatprep.subr.mxu0 0.0
    %399 = vmatpush2.msra.mxu0 0.0
    %400 = vmatprep.subr.mxu0 0.0
    %401 = vmatpush2.msra.mxu0 0.0
    %402 = vmatprep.subr.mxu0 0.0
    %403 = vmatpush2.msra.mxu0 0.0
    %404 = vmatprep.subr.mxu0 0.0
    %405 = vmatpush2.msra.mxu0 0.0
    %406 = vmatprep.subr.mxu0 0.0
    %407 = vmatpush2.msra.mxu0 0.0
    %408 = vmatprep.mubr.f32.mxu0 0.0
    %409 = vmatmul.mubr.f32.gmra.mxu0 %v321
    %v410 = vpop.f32.mrf.mxu0
    %v411 = vadd.f32 %v343, %v410
    %v412 = vpop.f32.mrf.mxu0
    %413 = vdwg.mxu0
    %v414 = vmax.f32 %v411, 0.0
    %v415 = vld [vmem:[#allocation6 + $0x4] sm:$0x1]
    %v416 = vlaneseq
    %v417 = vshrl.u32 %v416, 7
    %v418 = vsub.s32 0, %v417
    %v419 = vrot.slane %v415, %v418
    %v420 = vmul.f32 %v414, %v419
    %421 = vadd.xlane.f32.xlu0 %v420
    %v422 = vpop.xlane.xlu0 %421
    %v423 = vld [vmem:[#allocation6 + $0x5] sm:$0x1]
    %v424 = vlaneseq
    %v425 = vshrl.u32 %v424, 7
    %v426 = vsub.s32 0, %v425
    %v427 = vrot.slane %v423, %v426
    %v428 = vadd.f32 %v422, %v427
    %v429 = vxor.u32 %v428, 2147483648
    %v430 = vmul.f32 %v429, 1.442695
    %v431 = vpow.pop %v430
    %v432 = vadd.f32 %v431, 1.0
    %v433 = vrcp.pop %v432
    %v434 = vmul.f32 1.0, %v433
    %vm435 = vcmask 7168
    %436 = vst.msk [vmem:[%s3] sm:$0xff] %vm435, %v434
    // Predicated region
    $region26: #{tpu_custom_call.1} parent=1 // pred_check
      _
    $region27: #{tpu_custom_call.1} parent=1 // pred_check_branch
      %438 = sbr.rel (0) target = $region29
    $region28: #{tpu_custom_call.1} parent=1 // pred_region
      _
    $region29: #{tpu_custom_call.1} parent=1 // pred_fallthru
      _
    // Predicated region
    $region30: #{tpu_custom_call.1} parent=1 // pred_check
      _
    $region31: #{tpu_custom_call.1} parent=1 // pred_check_branch
      %440 = sbr.rel (0) target = $region33
    $region32: #{tpu_custom_call.1} parent=1 // pred_region
      _
    $region33: #{tpu_custom_call.1} parent=1 // pred_fallthru
      _
    %441 = vsyncpa [#allocation3], 1
    %442 = vsyncpa [#allocation5], 1

</llo_original>
